<compile_context>
chip_gen: v6e
topology: v6e:2x2x1
jax: 0.10.0
libtpu: 0.0.40
codegen_flags: <defaults>
</compile_context>

<pallas_src>
import jax
import jax.numpy as jnp
from jax.experimental import pallas as pl
from jax.experimental.pallas import tpu as pltpu


# itemsize -> native sublane packing of one vreg (f32:8, bf16:16, int8/fp8:32)
_SUBLANE_PACK = {4: 8, 2: 16, 1: 32}

# Below this slab size a single block is fine (pipelining overhead > benefit).
_MIN_PIPELINE_BYTES = 1 << 20


def _swish_kernel(x_ref, o_ref):
    x = x_ref[...]
    if x.dtype == jnp.float32 or x.dtype == jnp.bfloat16:
        # Native-precision compute: VPU/EUP are bf16-capable on v6e/v7x and
        # Mosaic upcasts internally on v5e.
        o_ref[...] = x * jax.nn.sigmoid(x)
    else:
        # TODO(synk): integer/fp8 swish has no quantization scale here, so the
        # output is not numerically meaningful as a quantized activation.
        # Use the single-EUP tanh form to keep 1-byte dtypes memory-bound.
        xf = x.astype(jnp.float32)
        sig = 0.5 * jnp.tanh(0.5 * xf) + 0.5
        o_ref[...] = (xf * sig).astype(o_ref.dtype)


def _xla_swish(x):
    """Plain-XLA swish, used for tiny tensors and ragged tails."""
    if x.dtype == jnp.float32 or x.dtype == jnp.bfloat16:
        return x * jax.nn.sigmoid(x)
    xf = x.astype(jnp.float32)
    return (xf * jax.nn.sigmoid(xf)).astype(x.dtype)


def _target_tile_bytes():
    """2 MiB tiles on v5e (8 MiB live double-buffered blocks, under the 16 MiB
    scoped-VMEM default); 4 MiB on v6e/v7x (16 MiB live, under 32 MiB)."""
    try:
        kind = jax.devices()[0].device_kind.lower()
    except Exception:
        kind = ""
    if ("v6" in kind) or ("v7" in kind) or ("7x" in kind):
        return 4 << 20
    return 2 << 20


def _choose_tile_rows(rows, lane_width, itemsize, sublane, target_tile_bytes):
    """Pick tile_rows (multiple of the sublane pack) for a (rows, lane_width)
    slab: big enough to amortize per-step overhead, small enough to give >= 4
    blocks (software pipelining) with an even block count (v7x megacore)."""
    row_bytes = lane_width * itemsize
    total_bytes = rows * row_bytes
    if total_bytes <= _MIN_PIPELINE_BYTES or rows < 4 * sublane:
        return rows  # single full-array block

    budget_rows = max(sublane, target_tile_bytes // row_bytes)
    budget_rows -= budget_rows % sublane
    pipe_rows = max(sublane, rows // 4)
    pipe_rows -= pipe_rows % sublane
    cap = min(budget_rows, pipe_rows)

    # Prefer an exact divisor of rows (no masked ragged last block), ideally
    # with an even block count so both v7x TensorCores get equal work.
    best_exact = None
    for cand in range(cap, sublane - 1, -sublane):
        if rows % cand == 0:
            if (rows // cand) % 2 == 0:
                return cand
            if best_exact is None:
                best_exact = cand
    if best_exact is not None:
        return best_exact
    return cap  # ragged last block, masked by Pallas


def _swish_2d(x2d, sublane, itemsize):
    rows, lane_width = x2d.shape
    tile_rows = _choose_tile_rows(rows, lane_width, itemsize, sublane,
                                  _target_tile_bytes())
    grid = (pl.cdiv(rows, tile_rows),)
    n_elems = rows * lane_width
    return pl.pallas_call(
        _swish_kernel,
        out_shape=jax.ShapeDtypeStruct((rows, lane_width), x2d.dtype),
        grid=grid,
        in_specs=[pl.BlockSpec((tile_rows, lane_width), lambda i: (i, 0))],
        out_specs=pl.BlockSpec((tile_rows, lane_width), lambda i: (i, 0)),
        compiler_params=pltpu.CompilerParams(
            dimension_semantics=("parallel",)),
        cost_estimate=pl.CostEstimate(
            flops=4 * n_elems,
            transcendentals=n_elems,
            bytes_accessed=2 * n_elems * itemsize),
    )(x2d)


def _swish_flat_aligned(flat, sublane, itemsize):
    """Swish on a flat array whose length is a multiple of 128."""
    n = flat.shape[0]
    lane_width = 128
    for cand in (1024, 512, 256, 128):
        if n % cand == 0:
            lane_width = cand
            break
    rows = n // lane_width
    out2d = _swish_2d(flat.reshape(rows, lane_width), sublane, itemsize)
    return out2d.reshape(-1)


def _pallas_swish(x):
    """Elementwise x * sigmoid(x) as a Pallas TPU kernel (any shape/dtype)."""
    orig_shape = x.shape
    dtype = x.dtype
    itemsize = jnp.dtype(dtype).itemsize
    sublane = _SUBLANE_PACK.get(itemsize, 8)
    n = x.size
    flat = x.reshape(-1)

    if n % 128 == 0:
        out_flat = _swish_flat_aligned(flat, sublane, itemsize)
    else:
        # Ragged element count: Pallas kernel on the 128*sublane-aligned head,
        # plain XLA on the tiny tail.  No full-tensor pad/slice round trips.
        chunk = 128 * sublane
        n_head = n - (n % chunk)
        if n_head == 0:
            out_flat = _xla_swish(flat)
        else:
            head = _swish_flat_aligned(flat[:n_head], sublane, itemsize)
            tail = _xla_swish(flat[n_head:])
            # TODO(synk): masking the tail in-kernel (broadcasted_iota compare)
            # would avoid this concat's extra pass over the output.
            out_flat = jnp.concatenate([head, tail])

    return out_flat.reshape(orig_shape)


def swish(x, *, pallas_min_elems=64 * 1024):
    """Swish / SiLU dispatcher.  Tiny tensors use XLA's fused elementwise path
    (pallas_call has a fixed launch + DMA setup cost of a few microseconds);
    larger tensors use the Pallas kernel."""
    if x.size < pallas_min_elems:
        return _xla_swish(x)
    return _pallas_swish(x)


class Lambda:
    """Wrap a function as a module (JAX/Pallas analogue of keras4torch Lambda)."""

    def __init__(self, fn):
        self.lambda_func = fn

    def __call__(self, *args):
        return self.lambda_func(*args)


if __name__ == "__main__":
    k0, k1, k2 = jax.random.split(jax.random.PRNGKey(0), 3)

    # Force the Pallas path (pallas_min_elems=0) so the kernel is exercised
    # even at demo sizes; the default dispatcher would route tiny tensors to
    # fused XLA.
    module = Lambda(lambda t: swish(t, pallas_min_elems=0))

    # Demo input consistent with the module (NCHW activation).
    x = jax.random.normal(k0, (2, 4, 16, 16), dtype=jnp.float32)
    y = jax.block_until_ready(module(x))
    ref = x * jax.nn.sigmoid(x)
    assert y.shape == x.shape and y.dtype == x.dtype
    assert jnp.allclose(y, ref, atol=1e-5, rtol=1e-5)

    # Larger slab: multi-block, software-pipelined, even block count.
    x_big = jax.random.normal(k1, (512, 2048), dtype=jnp.float32)
    y_big = jax.block_until_ready(module(x_big))
    assert jnp.allclose(y_big, x_big * jax.nn.sigmoid(x_big),
                        atol=1e-5, rtol=1e-5)

    # Ragged element count: Pallas head + XLA tail (no pad/slice).
    x_rag = jax.random.normal(k2, (5, 321), dtype=jnp.float32)
    y_rag = jax.block_until_ready(module(x_rag))
    assert jnp.allclose(y_rag, x_rag * jax.nn.sigmoid(x_rag),
                        atol=1e-5, rtol=1e-5)

    print("KERNEL_OK")
</pallas_src>

<mosaic_0001>
module attributes {stable_mosaic.version = 11 : i64} {
  func.func @_swish_kernel(%arg0: i32, %arg1: memref<2x1024xf32, #tpu.memory_space<vmem>>, %arg2: memref<2x1024xf32, #tpu.memory_space<vmem>>) attributes {dimension_semantics = [#tpu.dimension_semantics<parallel>], iteration_bounds = array<i64: 1>, scalar_prefetch = 0 : i64, scratch_operands = 0 : i64, tpu.core_type = #tpu.core_type<tc>, window_params = [{transform_indices = @transform_0, window_bounds = array<i64: 2, 1024>}, {transform_indices = @transform_1, window_bounds = array<i64: 2, 1024>}]} {
    %c0 = arith.constant 0 : index
    %c0_0 = arith.constant 0 : index
    %0 = vector.load %arg1[%c0, %c0_0] : memref<2x1024xf32, #tpu.memory_space<vmem>>, vector<2x1024xf32>
    %1 = arith.negf %0 : vector<2x1024xf32>
    %2 = math.exp %1 : vector<2x1024xf32>
    %cst = arith.constant 1.000000e+00 : f32
    %3 = vector.broadcast %cst : f32 to vector<2x1024xf32>
    %4 = arith.addf %3, %2 : vector<2x1024xf32>
    %5 = arith.divf %3, %4 : vector<2x1024xf32>
    %6 = arith.mulf %0, %5 : vector<2x1024xf32>
    %c0_1 = arith.constant 0 : index
    %c0_2 = arith.constant 0 : index
    %7 = vector.load %arg2[%c0_1, %c0_2] : memref<2x1024xf32, #tpu.memory_space<vmem>>, vector<2x1024xf32>
    tpu.vector_store %arg2[%c0_1, %c0_2], %6 {strides = array<i32>} : memref<2x1024xf32, #tpu.memory_space<vmem>>, vector<2x1024xf32>,
    return
  }
  func.func @transform_0(%arg0: i32) -> (i32, i32) {
    %c0_i32 = arith.constant 0 : i32
    %c0_i32_0 = arith.constant 0 : i32
    return %arg0, %c0_i32 : i32, i32
  }
  func.func @transform_1(%arg0: i32) -> (i32, i32) {
    %c0_i32 = arith.constant 0 : i32
    %c0_i32_0 = arith.constant 0 : i32
    return %arg0, %c0_i32 : i32, i32
  }
}

</mosaic_0001>

<llo_original>
// kernel: tpu_custom_call.1
$region0: #{tpu_custom_call.1}
  #allocation0 [shape = 'u32[]', space=smem, size = 0x4, offset = 0x4, fixed_abs, tag = 'smem constant byte address 0x4 - core index']
  #allocation1 [shape = 'u32[144,128]{1,0:T(1,128)}', space=vmem, size = 0x12000, scoped, tag = 'internal scratch']
  %s0 = inlined_call_operand.hbm [shape: f32[2,1024], index: 0, kind: input, shape index: {}]
  %s1 = inlined_call_operand.hbm [shape: f32[2,1024], index: 1, kind: output, shape index: {}]
  %s2 = sld [smem:[#allocation0]]
  $region18: #{tpu_custom_call.1} parent=0
    _
  %s4 = ssub.s32 1, %s2
  %s5 = scalar_select 0, %s4, %s2
  $region1: #{tpu_custom_call.1} parent=0
    #allocation2 [shape = 'u8[8192]{0}', space=vmem, size = 0x2000, scoped, tag = 'input window, operand 0, single buffered']
    #allocation3 [shape = 's32[1]{0}', space=sflag, size = 0x4, scoped, tag = 'scoped memory for tpu_custom_call.1']
    #allocation4 [shape = 's32[1]{0}', space=sflag, size = 0x4, scoped, tag = 'scoped memory for tpu_custom_call.1']
    #allocation5 [shape = 'u8[8192]{0}', space=vmem, size = 0x2000, scoped, tag = 'output window, operand 0, single buffered']
    %6 = vsyncpa [#allocation3], 0
    %7 = vsyncpa [#allocation4], 0
    // Predicated region
    $region2: #{tpu_custom_call.1} parent=1 // pred_check
      _
    $region3: #{tpu_custom_call.1} parent=1 // pred_check_branch
      %9 = sbr.rel (0) target = $region5
    $region4: #{tpu_custom_call.1} parent=1 // pred_region
      %s11 = ssub.s32 256, 256
      %12 = vsyncadd [#allocation3], %s11
      %s14 = sshll.u32 [#allocation2], 4
      %s15 = int_to_ptr.vmem [resolvable:$true] %s14
      %17 = dma.hbm_to_vmem [thread:$0]  %s0, 256, %s15, [#allocation3]
    $region5: #{tpu_custom_call.1} parent=1 // pred_fallthru
      _
    // Predicated region
    $region6: #{tpu_custom_call.1} parent=1 // pred_check
      _
    $region7: #{tpu_custom_call.1} parent=1 // pred_check_branch
      %19 = sbr.rel (0) target = $region9
    $region8: #{tpu_custom_call.1} parent=1 // pred_region
      %20 = dma.done [#allocation3], 256
    $region9: #{tpu_custom_call.1} parent=1 // pred_fallthru
      _
    %v21 = vld [vmem:[#allocation2] sm:$0xff]
    %v22 = vld [vmem:[#allocation2 + $0x8] sm:$0xff]
    %v23 = vxor.u32 %v21, 2147483648
    %v24 = vxor.u32 %v22, 2147483648
    %v25 = vmul.f32 %v23, 1.442695
    %v26 = vpow.pop %v25
    %v27 = vmul.f32 %v24, 1.442695
    %v28 = vpow.pop %v27
    %v29 = vadd.f32 %v26, 1.0
    %v30 = vadd.f32 %v28, 1.0
    %v31 = vrcp.pop %v29
    %v32 = vmul.f32 1.0, %v31
    %v33 = vrcp.pop %v30
    %v34 = vmul.f32 1.0, %v33
    %v35 = vmul.f32 %v21, %v32
    %v36 = vmul.f32 %v22, %v34
    %37 = vst [vmem:[#allocation5] sm:$0xff] %v35
    %38 = vst [vmem:[#allocation5 + $0x8] sm:$0xff] %v36
    // Predicated region
    $region10: #{tpu_custom_call.1} parent=1 // pred_check
      _
    $region11: #{tpu_custom_call.1} parent=1 // pred_check_branch
      %40 = sbr.rel (0) target = $region13
    $region12: #{tpu_custom_call.1} parent=1 // pred_region
      %s42 = ssub.s32 256, 256
      %43 = vsyncadd [#allocation4], %s42
      %s45 = sshll.u32 [#allocation5], 4
      %s46 = int_to_ptr.vmem [resolvable:$true] %s45
      %48 = dma.vmem_to_hbm [thread:$0]  %s46, 256, %s1, [#allocation4]
    $region13: #{tpu_custom_call.1} parent=1 // pred_fallthru
      _
    // Predicated region
    $region14: #{tpu_custom_call.1} parent=1 // pred_check
      _
    $region15: #{tpu_custom_call.1} parent=1 // pred_check_branch
      %50 = sbr.rel (0) target = $region17
    $region16: #{tpu_custom_call.1} parent=1 // pred_region
      %51 = dma.done [#allocation4], 256
    $region17: #{tpu_custom_call.1} parent=1 // pred_fallthru
      _
    %52 = vsyncpa [#allocation3], 1
    %53 = vsyncpa [#allocation4], 1

</llo_original>
